<compile_context>
chip_gen: v6e
topology: v6e:2x2x1
jax: 0.10.0
libtpu: 0.0.40
codegen_flags: <defaults>
</compile_context>

<pallas_src>
import functools

import jax
import jax.numpy as jnp
from jax.experimental import pallas as pl
from jax.experimental.pallas import tpu as pltpu

# ---- synthetic config (mirrors the shapes implied by the module __init__) ----
VOCAB_SIZE = 50
EMBED_DIM = 32           # embedding_dim
OUTPUT_DIM = 16          # output_dim
KERNEL_SIZES = (3, 4, 5)
STRIDE = 1
BATCH = 2
SEQ_LEN = 16


def _cnn1d_kernel(ids_ref, table_ref, wcat_ref, bcat_ref, limit_ref,
                  fcw_ref, fcb_ref, out_ref, *, tile_batch, seq_len, max_ks):
    """One-hot embed + fused 3-branch conv1d + ReLU + masked max-pool + FC."""
    blt = tile_batch * seq_len                     # rows in this batch tile
    vocab = table_ref.shape[0]
    ch = wcat_ref.shape[-1]                        # 3 * output_dim

    # 1) embedding as a one-hot matmul on the MXU (exact row selection in f32)
    ids = ids_ref[...]                                                  # (blt, 1) i32
    vocab_iota = jax.lax.broadcasted_iota(jnp.int32, (blt, vocab), 1)
    onehot = (vocab_iota == ids).astype(jnp.float32)                    # (blt, V)
    emb = jnp.dot(onehot, table_ref[...],
                  preferred_element_type=jnp.float32)                   # (blt, E)

    # 2) im2col slab: tap-k block is the rows shifted up by k (pltpu.roll == np.roll;
    #    wrapped rows only land on positions that are masked out below or multiply
    #    zero-padded weight taps, so the circular wrap is harmless).
    taps = [emb] + [pltpu.roll(emb, shift=blt - k, axis=0) for k in range(1, max_ks)]
    slab = jnp.concatenate(taps, axis=-1)                               # (blt, max_ks*E)

    # 3) all three conv branches in ONE MXU dot, then bias + ReLU
    conv = jnp.dot(slab, wcat_ref[...],
                   preferred_element_type=jnp.float32)                  # (blt, 3*O)
    act = jnp.maximum(conv + bcat_ref[...], 0.0)

    # 4) mask per-branch invalid tail positions, then batched global max-pool.
    #    Masking to 0 is safe post-ReLU (all valid outputs are >= 0).
    act3 = act.reshape(tile_batch, seq_len, ch)                         # (TB, L, 3*O)
    pos = jax.lax.broadcasted_iota(jnp.int32, (tile_batch, seq_len, ch), 1)
    act3 = jnp.where(pos <= limit_ref[...], act3, 0.0)
    pooled = jnp.max(act3, axis=1)                                      # (TB, 3*O)

    # 5) FC head -- pooled channel order already matches torch.cat([ks=3, ks=4, ks=5])
    out = jnp.dot(pooled, fcw_ref[...],
                  preferred_element_type=jnp.float32) + fcb_ref[...]    # (TB, O)
    out_ref[...] = out[:, None, :].astype(out_ref.dtype)


def cnn1d_forward(x_ids, params):
    # TODO(synk): kernel assumes STRIDE == 1 (roll-by-1 taps); stride > 1 would need a
    # downsample of the fused conv rows before pooling.
    assert STRIDE == 1
    batch, seq_len = x_ids.shape
    emb_dim, out_dim = EMBED_DIM, OUTPUT_DIM
    max_ks = max(KERNEL_SIZES)
    ch = len(KERNEL_SIZES) * out_dim

    # Fuse branch weights: wcat[k*E:(k+1)*E, i*O:(i+1)*O] = conv_i tap k (zero-pad k>=ks_i)
    w_rows = []
    for k in range(max_ks):
        cols = [params[f"conv{ks}_w"][k] if k < ks
                else jnp.zeros((emb_dim, out_dim), jnp.float32)
                for ks in KERNEL_SIZES]
        w_rows.append(jnp.concatenate(cols, axis=-1))                   # (E, 3*O)
    wcat = jnp.concatenate(w_rows, axis=0)                              # (max_ks*E, 3*O)
    bcat = jnp.concatenate([params[f"conv{ks}_b"] for ks in KERNEL_SIZES],
                           axis=-1)                                     # (1, 3*O)
    # last valid sequence position per channel: L - ks for its branch
    limit = jnp.repeat(jnp.asarray([seq_len - ks for ks in KERNEL_SIZES],
                                   dtype=jnp.int32), out_dim)[None, :]  # (1, 3*O)

    ids_flat = x_ids.reshape(batch * seq_len, 1).astype(jnp.int32)

    tb = 1                                  # batch tile per grid step
    grid = (batch // tb,)
    kernel = functools.partial(_cnn1d_kernel, tile_batch=tb, seq_len=seq_len,
                               max_ks=max_ks)

    out = pl.pallas_call(
        kernel,
        out_shape=jax.ShapeDtypeStruct((batch, 1, out_dim), jnp.float32),
        grid=grid,
        in_specs=[
            pl.BlockSpec((tb * seq_len, 1), lambda i: (i, 0)),          # token ids (tiled)
            pl.BlockSpec((VOCAB_SIZE, emb_dim), lambda i: (0, 0)),      # embedding table
            pl.BlockSpec((max_ks * emb_dim, ch), lambda i: (0, 0)),     # fused conv weight
            pl.BlockSpec((1, ch), lambda i: (0, 0)),                    # fused conv bias
            pl.BlockSpec((1, ch), lambda i: (0, 0)),                    # valid-pos limits
            pl.BlockSpec((ch, out_dim), lambda i: (0, 0)),              # fc weight
            pl.BlockSpec((1, out_dim), lambda i: (0, 0)),               # fc bias
        ],
        out_specs=pl.BlockSpec((tb, 1, out_dim), lambda i: (i, 0, 0)),
        compiler_params=pltpu.CompilerParams(dimension_semantics=("parallel",)),
    )(ids_flat, params["embedding"], wcat, bcat, limit,
      params["fc_w"], params["fc_b"])
    return out[:, 0, :]                                                 # (B, O)


def init_params(key):
    n_keys = 1 + 2 * len(KERNEL_SIZES) + 2
    keys = jax.random.split(key, n_keys)
    params = {"embedding": jax.random.normal(keys[0], (VOCAB_SIZE, EMBED_DIM),
                                             jnp.float32) * 0.1}
    ki = 1
    for ks in KERNEL_SIZES:
        params[f"conv{ks}_w"] = jax.random.normal(
            keys[ki], (ks, EMBED_DIM, OUTPUT_DIM), jnp.float32) * 0.1
        params[f"conv{ks}_b"] = jax.random.normal(
            keys[ki + 1], (1, OUTPUT_DIM), jnp.float32) * 0.1
        ki += 2
    params["fc_w"] = jax.random.normal(
        keys[ki], (len(KERNEL_SIZES) * OUTPUT_DIM, OUTPUT_DIM), jnp.float32) * 0.1
    params["fc_b"] = jax.random.normal(
        keys[ki + 1], (1, OUTPUT_DIM), jnp.float32) * 0.1
    return params


def reference_forward(x_ids, params):
    """Pure-JAX reference matching the PyTorch forward semantics."""
    emb = jnp.take(params["embedding"], x_ids, axis=0)       # (B, L, E)
    _, seq_len, _ = emb.shape
    pooled = []
    for ks in KERNEL_SIZES:
        w = params[f"conv{ks}_w"]                            # (ks, E, O)
        b = params[f"conv{ks}_b"]                            # (1, O)
        l_out = (seq_len - ks) // STRIDE + 1
        acc = jnp.zeros((x_ids.shape[0], l_out, OUTPUT_DIM), jnp.float32)
        for k in range(ks):
            xk = emb[:, k:k + (l_out - 1) * STRIDE + 1:STRIDE, :]
            acc = acc + jnp.einsum("ble,eo->blo", xk, w[k])
        acc = jnp.maximum(acc + b, 0.0)
        pooled.append(jnp.max(acc, axis=1))                  # (B, O)
    cat = jnp.concatenate(pooled, axis=-1)                   # (B, 3*O)
    return cat @ params["fc_w"] + params["fc_b"]


if __name__ == "__main__":
    root = jax.random.PRNGKey(0)
    k_params, k_tokens = jax.random.split(root)
    params = init_params(k_params)
    x = jax.random.randint(k_tokens, (BATCH, SEQ_LEN), 0, VOCAB_SIZE,
                           dtype=jnp.int32)

    out = cnn1d_forward(x, params)
    out = jax.block_until_ready(out)

    ref = reference_forward(x, params)
    assert out.shape == (BATCH, OUTPUT_DIM)
    assert jnp.allclose(out, ref, rtol=1e-4, atol=1e-4), "mismatch vs JAX reference"

    print("KERNEL_OK")
</pallas_src>

<mosaic_0001>
module attributes {stable_mosaic.version = 11 : i64} {
  func.func @_cnn1d_kernel(%arg0: i32, %arg1: memref<16x1xi32, #tpu.memory_space<vmem>>, %arg2: memref<50x32xf32, #tpu.memory_space<vmem>>, %arg3: memref<160x48xf32, #tpu.memory_space<vmem>>, %arg4: memref<1x48xf32, #tpu.memory_space<vmem>>, %arg5: memref<1x48xi32, #tpu.memory_space<vmem>>, %arg6: memref<48x16xf32, #tpu.memory_space<vmem>>, %arg7: memref<1x16xf32, #tpu.memory_space<vmem>>, %arg8: memref<1x1x16xf32, #tpu.memory_space<vmem>>) attributes {dimension_semantics = [#tpu.dimension_semantics<parallel>], iteration_bounds = array<i64: 2>, scalar_prefetch = 0 : i64, scratch_operands = 0 : i64, tpu.core_type = #tpu.core_type<tc>, window_params = [{transform_indices = @transform_0, window_bounds = array<i64: 16, 1>}, {pipeline_mode = #tpu.pipeline_mode<synchronous>, transform_indices = @transform_1, window_bounds = array<i64: 50, 32>}, {pipeline_mode = #tpu.pipeline_mode<synchronous>, transform_indices = @transform_2, window_bounds = array<i64: 160, 48>}, {pipeline_mode = #tpu.pipeline_mode<synchronous>, transform_indices = @transform_3, window_bounds = array<i64: 1, 48>}, {pipeline_mode = #tpu.pipeline_mode<synchronous>, transform_indices = @transform_4, window_bounds = array<i64: 1, 48>}, {pipeline_mode = #tpu.pipeline_mode<synchronous>, transform_indices = @transform_5, window_bounds = array<i64: 48, 16>}, {pipeline_mode = #tpu.pipeline_mode<synchronous>, transform_indices = @transform_6, window_bounds = array<i64: 1, 16>}, {transform_indices = @transform_7, window_bounds = array<i64: 1, 1, 16>}]} {
    %c0 = arith.constant 0 : index
    %c0_0 = arith.constant 0 : index
    %0 = vector.load %arg1[%c0, %c0_0] : memref<16x1xi32, #tpu.memory_space<vmem>>, vector<16x1xi32>
    %1 = tpu.iota {dimensions = array<i32: 1>} : vector<16x50xi32>
    %2 = vector.broadcast %0 : vector<16x1xi32> to vector<16x50xi32>
    %3 = arith.cmpi eq, %1, %2 : vector<16x50xi32>
    %4 = arith.extui %3 : vector<16x50xi1> to vector<16x50xi32>
    %5 = arith.sitofp %4 : vector<16x50xi32> to vector<16x50xf32>
    %c0_1 = arith.constant 0 : index
    %c0_2 = arith.constant 0 : index
    %6 = vector.load %arg2[%c0_1, %c0_2] : memref<50x32xf32, #tpu.memory_space<vmem>>, vector<50x32xf32>
    %cst = arith.constant dense<0.000000e+00> : vector<16x32xf32>
    %7 = tpu.matmul %5, %6, %cst {dimension_numbers = #tpu.dot_dimension_numbers<[1], [0], [0], [1], [0, 0, 1, 1], [], []>} : vector<16x50xf32>, vector<50x32xf32>, vector<16x32xf32> -> vector<16x32xf32>
    %c15_i32 = arith.constant 15 : i32
    %8 = tpu.dynamic_rotate %7 by %c15_i32 dim 0 : vector<16x32xf32>, i32 -> vector<16x32xf32>
    %c14_i32 = arith.constant 14 : i32
    %9 = tpu.dynamic_rotate %7 by %c14_i32 dim 0 : vector<16x32xf32>, i32 -> vector<16x32xf32>
    %c13_i32 = arith.constant 13 : i32
    %10 = tpu.dynamic_rotate %7 by %c13_i32 dim 0 : vector<16x32xf32>, i32 -> vector<16x32xf32>
    %c12_i32 = arith.constant 12 : i32
    %11 = tpu.dynamic_rotate %7 by %c12_i32 dim 0 : vector<16x32xf32>, i32 -> vector<16x32xf32>
    %12 = tpu.concatenate %7, %8, %9, %10, %11 in 1 : vector<16x32xf32>, vector<16x32xf32>, vector<16x32xf32>, vector<16x32xf32>, vector<16x32xf32> -> vector<16x160xf32>
    %c0_3 = arith.constant 0 : index
    %c0_4 = arith.constant 0 : index
    %13 = vector.load %arg3[%c0_3, %c0_4] : memref<160x48xf32, #tpu.memory_space<vmem>>, vector<160x48xf32>
    %cst_5 = arith.constant dense<0.000000e+00> : vector<16x48xf32>
    %14 = tpu.matmul %12, %13, %cst_5 {dimension_numbers = #tpu.dot_dimension_numbers<[1], [0], [0], [1], [0, 0, 1, 1], [], []>} : vector<16x160xf32>, vector<160x48xf32>, vector<16x48xf32> -> vector<16x48xf32>
    %c0_6 = arith.constant 0 : index
    %c0_7 = arith.constant 0 : index
    %15 = vector.load %arg4[%c0_6, %c0_7] : memref<1x48xf32, #tpu.memory_space<vmem>>, vector<1x48xf32>
    %16 = vector.broadcast %15 : vector<1x48xf32> to vector<16x48xf32>
    %17 = arith.addf %14, %16 : vector<16x48xf32>
    %cst_8 = arith.constant 0.000000e+00 : f32
    %18 = vector.broadcast %cst_8 : f32 to vector<16x48xf32>
    %19 = arith.maximumf %17, %18 : vector<16x48xf32>
    %20 = vector.shape_cast %19 : vector<16x48xf32> to vector<1x16x48xf32>
    %21 = tpu.iota {dimensions = array<i32: 1>} : vector<1x16x48xi32>
    %c0_9 = arith.constant 0 : index
    %c0_10 = arith.constant 0 : index
    %22 = vector.load %arg5[%c0_9, %c0_10] : memref<1x48xi32, #tpu.memory_space<vmem>>, vector<1x48xi32>
    %23 = vector.shape_cast %22 : vector<1x48xi32> to vector<1x1x48xi32>
    %24 = vector.broadcast %23 : vector<1x1x48xi32> to vector<1x16x48xi32>
    %25 = arith.cmpi sle, %21, %24 : vector<1x16x48xi32>
    %cst_11 = arith.constant 0.000000e+00 : f32
    %26 = vector.broadcast %cst_11 : f32 to vector<1x16x48xf32>
    %27 = arith.select %25, %20, %26 : vector<1x16x48xi1>, vector<1x16x48xf32>
    %cst_12 = arith.constant dense<0xFF800000> : vector<1x48xf32>
    %28 = vector.multi_reduction <maximumf>, %27, %cst_12 [1] : vector<1x16x48xf32> to vector<1x48xf32>
    %c0_13 = arith.constant 0 : index
    %c0_14 = arith.constant 0 : index
    %29 = vector.load %arg6[%c0_13, %c0_14] : memref<48x16xf32, #tpu.memory_space<vmem>>, vector<48x16xf32>
    %cst_15 = arith.constant dense<0.000000e+00> : vector<1x16xf32>
    %30 = tpu.matmul %28, %29, %cst_15 {dimension_numbers = #tpu.dot_dimension_numbers<[1], [0], [0], [1], [0, 0, 1, 1], [], []>} : vector<1x48xf32>, vector<48x16xf32>, vector<1x16xf32> -> vector<1x16xf32>
    %c0_16 = arith.constant 0 : index
    %c0_17 = arith.constant 0 : index
    %31 = vector.load %arg7[%c0_16, %c0_17] : memref<1x16xf32, #tpu.memory_space<vmem>>, vector<1x16xf32>
    %32 = arith.addf %30, %31 : vector<1x16xf32>
    %33 = vector.shape_cast %32 : vector<1x16xf32> to vector<1x1x16xf32>
    %c0_18 = arith.constant 0 : index
    %c0_19 = arith.constant 0 : index
    %c0_20 = arith.constant 0 : index
    %34 = vector.load %arg8[%c0_18, %c0_19, %c0_20] : memref<1x1x16xf32, #tpu.memory_space<vmem>>, vector<1x1x16xf32>
    tpu.vector_store %arg8[%c0_18, %c0_19, %c0_20], %33 {strides = array<i32>} : memref<1x1x16xf32, #tpu.memory_space<vmem>>, vector<1x1x16xf32>,
    return
  }
  func.func @transform_0(%arg0: i32) -> (i32, i32) {
    %c0_i32 = arith.constant 0 : i32
    %c0_i32_0 = arith.constant 0 : i32
    return %arg0, %c0_i32 : i32, i32
  }
  func.func @transform_1(%arg0: i32) -> (i32, i32) {
    %c0_i32 = arith.constant 0 : i32
    %c0_i32_0 = arith.constant 0 : i32
    %c0_i32_1 = arith.constant 0 : i32
    return %c0_i32, %c0_i32_0 : i32, i32
  }
  func.func @transform_2(%arg0: i32) -> (i32, i32) {
    %c0_i32 = arith.constant 0 : i32
    %c0_i32_0 = arith.constant 0 : i32
    %c0_i32_1 = arith.constant 0 : i32
    return %c0_i32, %c0_i32_0 : i32, i32
  }
  func.func @transform_3(%arg0: i32) -> (i32, i32) {
    %c0_i32 = arith.constant 0 : i32
    %c0_i32_0 = arith.constant 0 : i32
    %c0_i32_1 = arith.constant 0 : i32
    return %c0_i32, %c0_i32_0 : i32, i32
  }
  func.func @transform_4(%arg0: i32) -> (i32, i32) {
    %c0_i32 = arith.constant 0 : i32
    %c0_i32_0 = arith.constant 0 : i32
    %c0_i32_1 = arith.constant 0 : i32
    return %c0_i32, %c0_i32_0 : i32, i32
  }
  func.func @transform_5(%arg0: i32) -> (i32, i32) {
    %c0_i32 = arith.constant 0 : i32
    %c0_i32_0 = arith.constant 0 : i32
    %c0_i32_1 = arith.constant 0 : i32
    return %c0_i32, %c0_i32_0 : i32, i32
  }
  func.func @transform_6(%arg0: i32) -> (i32, i32) {
    %c0_i32 = arith.constant 0 : i32
    %c0_i32_0 = arith.constant 0 : i32
    %c0_i32_1 = arith.constant 0 : i32
    return %c0_i32, %c0_i32_0 : i32, i32
  }
  func.func @transform_7(%arg0: i32) -> (i32, i32, i32) {
    %c0_i32 = arith.constant 0 : i32
    %c0_i32_0 = arith.constant 0 : i32
    %c0_i32_1 = arith.constant 0 : i32
    return %arg0, %c0_i32, %c0_i32_0 : i32, i32, i32
  }
}

</mosaic_0001>

<llo_original>
// kernel: tpu_custom_call.1
$region0: #{tpu_custom_call.1}
  #allocation0 [shape = 'u32[]', space=smem, size = 0x4, offset = 0x4, fixed_abs, tag = 'smem constant byte address 0x4 - core index']
  #allocation1 [shape = 'u32[144,128]{1,0:T(1,128)}', space=vmem, size = 0x12000, scoped, tag = 'internal scratch']
  %s0 = inlined_call_operand.vmem [shape: s32[32,1], index: 0, kind: input, shape index: {}]
  %s1 = inlined_call_operand.vmem [shape: f32[50,32], index: 1, kind: input, shape index: {}]
  %s2 = inlined_call_operand.vmem [shape: f32[160,48], index: 2, kind: input, shape index: {}]
  %s3 = inlined_call_operand.vmem [shape: f32[1,48], index: 3, kind: input, shape index: {}]
  %s4 = inlined_call_operand.vmem [shape: s32[1,48], index: 4, kind: input, shape index: {}]
  %s5 = inlined_call_operand.vmem [shape: f32[48,16], index: 5, kind: input, shape index: {}]
  %s6 = inlined_call_operand.vmem [shape: f32[1,16], index: 6, kind: input, shape index: {}]
  %s7 = inlined_call_operand.hbm [shape: f32[2,1,16], index: 7, kind: output, shape index: {}]
  %s8 = sld [smem:[#allocation0]]
  $region61: #{tpu_custom_call.1} parent=0
    _
  %s10 = ssub.s32 1, %s8
  %s11 = scalar_select 0, %s10, %s8
  $region1: #{tpu_custom_call.1} parent=0
    #allocation2 [shape = 'u8[1024]{0}', space=vmem, size = 0x400, scoped, tag = 'output window, operand 0']
    #allocation3 [shape = 's32[2]{0}', space=sflag, size = 0x8, scoped, tag = 'scoped memory for tpu_custom_call.1']
    %12 = vsyncpa [#allocation3], 0
    %s13 = scalar_lea.sflag [#allocation3], 1
    %14 = vsyncpa %s13, 0
    loop: start=0, step=1, limit=4
    $region2: #{tpu_custom_call.1} parent=1 // loop_pre_header
      _
    $region3: #{tpu_custom_call.1} parent=1 // loop_header
      %s16 = sphi 0, %s20
      %p17 = scmp.ge.s32.totalorder %s16, 4
      %s26 = sphi 0, %s28
      %s29 = sphi 0, %s26
      %s30 = sphi 0, %s29
      %s46 = sphi 0, %s30
      %s50 = sphi 0, %s50
      %s52 = sphi 0, %s50
      %s53 = sphi 0, %s52
      %s67 = sphi 0, %s53
      %s71 = sphi 0, %s71
      %s73 = sphi 0, %s71
      %s74 = sphi 0, %s73
      %s88 = sphi 0, %s74
      %s92 = sphi 0, %s92
      %s94 = sphi 0, %s92
      %s95 = sphi 0, %s94
      %s109 = sphi 0, %s95
      %s113 = sphi 0, %s113
      %s115 = sphi 0, %s113
      %s116 = sphi 0, %s115
      %s130 = sphi 0, %s116
      %s134 = sphi 0, %s134
      %s136 = sphi 0, %s134
      %s137 = sphi 0, %s136
      %s151 = sphi 0, %s137
      %s155 = sphi 0, %s155
      %s157 = sphi 0, %s155
      %s158 = sphi 0, %s157
      %s172 = sphi 0, %s158
      %s178 = sphi 0, %s180
      %s181 = sphi 0, %s178
      %s182 = sphi 0, %s181
      %s198 = sphi 0, %s182
    $region4: #{tpu_custom_call.1} parent=1 // loop_header_branch
      %19 = sbr.rel (%p17) target = $region8
    $region5: #{tpu_custom_call.1} parent=1 // loop_body
      %s21 = ssub.s32 %s16, 1
      %s22 = ssub.s32 %s16, 2
      %s23 = sadd.s32 %s16, 1
      %s24 = ssub.s32 %s16, %s23
      %p25 = scmp.eq.s32.totalorder %s24, 0
      %s27 = sadd.s32 %s26, 1
      %s28 = scalar_select %p25, %s26, %s27
      %p31 = pneg %p25
      %p32 = scmp.eq.s32.totalorder %s16, 1
      %p33 = por %p31, %p32
      %p34 = scmp.ne.s32.totalorder %s26, %s29
      %p35 = scmp.eq.s32.totalorder %s16, 0
      %p36 = por %p34, %p35
      %p37 = scmp.ne.s32.totalorder %s26, %s29
      %p38 = scmp.eq.s32.totalorder %s21, 1
      %p39 = por %p37, %p38
      %p40 = scmp.ne.s32.totalorder %s29, %s30
      %p41 = scmp.eq.s32.totalorder %s21, 0
      %p42 = por %p40, %p41
      %p43 = scmp.ne.s32.totalorder %s29, %s30
      %p44 = scmp.eq.s32.totalorder %s22, 1
      %p45 = por %p43, %p44
      %p47 = scmp.ne.s32.totalorder %s30, %s46
      %p48 = scmp.eq.s32.totalorder %s22, 0
      %p49 = por %p47, %p48
      %s51 = sadd.s32 %s50, 1
      %p54 = scmp.eq.s32.totalorder %s16, 1
      %p55 = scmp.ne.s32.totalorder %s50, %s52
      %p56 = scmp.eq.s32.totalorder %s16, 0
      %p57 = por %p55, %p56
      %p58 = scmp.ne.s32.totalorder %s50, %s52
      %p59 = scmp.eq.s32.totalorder %s21, 1
      %p60 = por %p58, %p59
      %p61 = scmp.ne.s32.totalorder %s52, %s53
      %p62 = scmp.eq.s32.totalorder %s21, 0
      %p63 = por %p61, %p62
      %p64 = scmp.ne.s32.totalorder %s52, %s53
      %p65 = scmp.eq.s32.totalorder %s22, 1
      %p66 = por %p64, %p65
      %p68 = scmp.ne.s32.totalorder %s53, %s67
      %p69 = scmp.eq.s32.totalorder %s22, 0
      %p70 = por %p68, %p69
      %s72 = sadd.s32 %s71, 1
      %p75 = scmp.eq.s32.totalorder %s16, 1
      %p76 = scmp.ne.s32.totalorder %s71, %s73
      %p77 = scmp.eq.s32.totalorder %s16, 0
      %p78 = por %p76, %p77
      %p79 = scmp.ne.s32.totalorder %s71, %s73
      %p80 = scmp.eq.s32.totalorder %s21, 1
      %p81 = por %p79, %p80
      %p82 = scmp.ne.s32.totalorder %s73, %s74
      %p83 = scmp.eq.s32.totalorder %s21, 0
      %p84 = por %p82, %p83
      %p85 = scmp.ne.s32.totalorder %s73, %s74
      %p86 = scmp.eq.s32.totalorder %s22, 1
      %p87 = por %p85, %p86
      %p89 = scmp.ne.s32.totalorder %s74, %s88
      %p90 = scmp.eq.s32.totalorder %s22, 0
      %p91 = por %p89, %p90
      %s93 = sadd.s32 %s92, 1
      %p96 = scmp.eq.s32.totalorder %s16, 1
      %p97 = scmp.ne.s32.totalorder %s92, %s94
      %p98 = scmp.eq.s32.totalorder %s16, 0
      %p99 = por %p97, %p98
      %p100 = scmp.ne.s32.totalorder %s92, %s94
      %p101 = scmp.eq.s32.totalorder %s21, 1
      %p102 = por %p100, %p101
      %p103 = scmp.ne.s32.totalorder %s94, %s95
      %p104 = scmp.eq.s32.totalorder %s21, 0
      %p105 = por %p103, %p104
      %p106 = scmp.ne.s32.totalorder %s94, %s95
      %p107 = scmp.eq.s32.totalorder %s22, 1
      %p108 = por %p106, %p107
      %p110 = scmp.ne.s32.totalorder %s95, %s109
      %p111 = scmp.eq.s32.totalorder %s22, 0
      %p112 = por %p110, %p111
      %s114 = sadd.s32 %s113, 1
      %p117 = scmp.eq.s32.totalorder %s16, 1
      %p118 = scmp.ne.s32.totalorder %s113, %s115
      %p119 = scmp.eq.s32.totalorder %s16, 0
      %p120 = por %p118, %p119
      %p121 = scmp.ne.s32.totalorder %s113, %s115
      %p122 = scmp.eq.s32.totalorder %s21, 1
      %p123 = por %p121, %p122
      %p124 = scmp.ne.s32.totalorder %s115, %s116
      %p125 = scmp.eq.s32.totalorder %s21, 0
      %p126 = por %p124, %p125
      %p127 = scmp.ne.s32.totalorder %s115, %s116
      %p128 = scmp.eq.s32.totalorder %s22, 1
      %p129 = por %p127, %p128
      %p131 = scmp.ne.s32.totalorder %s116, %s130
      %p132 = scmp.eq.s32.totalorder %s22, 0
      %p133 = por %p131, %p132
      %s135 = sadd.s32 %s134, 1
      %p138 = scmp.eq.s32.totalorder %s16, 1
      %p139 = scmp.ne.s32.totalorder %s134, %s136
      %p140 = scmp.eq.s32.totalorder %s16, 0
      %p141 = por %p139, %p140
      %p142 = scmp.ne.s32.totalorder %s134, %s136
      %p143 = scmp.eq.s32.totalorder %s21, 1
      %p144 = por %p142, %p143
      %p145 = scmp.ne.s32.totalorder %s136, %s137
      %p146 = scmp.eq.s32.totalorder %s21, 0
      %p147 = por %p145, %p146
      %p148 = scmp.ne.s32.totalorder %s136, %s137
      %p149 = scmp.eq.s32.totalorder %s22, 1
      %p150 = por %p148, %p149
      %p152 = scmp.ne.s32.totalorder %s137, %s151
      %p153 = scmp.eq.s32.totalorder %s22, 0
      %p154 = por %p152, %p153
      %s156 = sadd.s32 %s155, 1
      %p159 = scmp.eq.s32.totalorder %s16, 1
      %p160 = scmp.ne.s32.totalorder %s155, %s157
      %p161 = scmp.eq.s32.totalorder %s16, 0
      %p162 = por %p160, %p161
      %p163 = scmp.ne.s32.totalorder %s155, %s157
      %p164 = scmp.eq.s32.totalorder %s21, 1
      %p165 = por %p163, %p164
      %p166 = scmp.ne.s32.totalorder %s157, %s158
      %p167 = scmp.eq.s32.totalorder %s21, 0
      %p168 = por %p166, %p167
      %p169 = scmp.ne.s32.totalorder %s157, %s158
      %p170 = scmp.eq.s32.totalorder %s22, 1
      %p171 = por %p169, %p170
      %p173 = scmp.ne.s32.totalorder %s158, %s172
      %p174 = scmp.eq.s32.totalorder %s22, 0
      %p175 = por %p173, %p174
      %s176 = ssub.s32 %s16, %s23
      %p177 = scmp.eq.s32.totalorder %s176, 0
      %s179 = sadd.s32 %s178, 1
      %s180 = scalar_select %p177, %s178, %s179
      %p183 = pneg %p177
      %p184 = scmp.eq.s32.totalorder %s16, 1
      %p185 = por %p183, %p184
      %p186 = scmp.ne.s32.totalorder %s178, %s181
      %p187 = scmp.eq.s32.totalorder %s16, 0
      %p188 = por %p186, %p187
      %p189 = scmp.ne.s32.totalorder %s178, %s181
      %p190 = scmp.eq.s32.totalorder %s21, 1
      %p191 = por %p189, %p190
      %p192 = scmp.ne.s32.totalorder %s181, %s182
      %p193 = scmp.eq.s32.totalorder %s21, 0
      %p194 = por %p192, %p193
      %p195 = scmp.ne.s32.totalorder %s181, %s182
      %p196 = scmp.eq.s32.totalorder %s22, 1
      %p197 = por %p195, %p196
      %p199 = scmp.ne.s32.totalorder %s182, %s198
      %p200 = scmp.eq.s32.totalorder %s22, 0
      %p201 = por %p199, %p200
      %p202 = scmp.le.s32.totalorder 1, %s16
      %p203 = scmp.lt.s32.totalorder %s16, 3
      %p204 = pnand %p202, %p203
      %p205 = pneg %p204
      // Predicated region
      $region9: #{tpu_custom_call.1} parent=5 // pred_check
        _
      $region10: #{tpu_custom_call.1} parent=5 // pred_check_branch
        %207 = sbr.rel (%p204) target = $region12
      $region11: #{tpu_custom_call.1} parent=5 // pred_region
        %s208 = ssub.s32 %s16, 1
        // Predicated region
        $region13: #{tpu_custom_call.1} parent=11 // pred_check
          %p209 = pneg %p63
        $region14: #{tpu_custom_call.1} parent=11 // pred_check_branch
          %211 = sbr.rel (%p209) target = $region16
        $region15: #{tpu_custom_call.1} parent=11 // pred_region
          _
        $region16: #{tpu_custom_call.1} parent=11 // pred_fallthru
          _
        // Predicated region
        $region17: #{tpu_custom_call.1} parent=11 // pred_check
          %p212 = pneg %p84
        $region18: #{tpu_custom_call.1} parent=11 // pred_check_branch
          %214 = sbr.rel (%p212) target = $region20
        $region19: #{tpu_custom_call.1} parent=11 // pred_region
          _
        $region20: #{tpu_custom_call.1} parent=11 // pred_fallthru
          _
        // Predicated region
        $region21: #{tpu_custom_call.1} parent=11 // pred_check
          %p215 = pneg %p105
        $region22: #{tpu_custom_call.1} parent=11 // pred_check_branch
          %217 = sbr.rel (%p215) target = $region24
        $region23: #{tpu_custom_call.1} parent=11 // pred_region
          _
        $region24: #{tpu_custom_call.1} parent=11 // pred_fallthru
          _
        // Predicated region
        $region25: #{tpu_custom_call.1} parent=11 // pred_check
          %p218 = pneg %p126
        $region26: #{tpu_custom_call.1} parent=11 // pred_check_branch
          %220 = sbr.rel (%p218) target = $region28
        $region27: #{tpu_custom_call.1} parent=11 // pred_region
          _
        $region28: #{tpu_custom_call.1} parent=11 // pred_fallthru
          _
        // Predicated region
        $region29: #{tpu_custom_call.1} parent=11 // pred_check
          %p221 = pneg %p147
        $region30: #{tpu_custom_call.1} parent=11 // pred_check_branch
          %223 = sbr.rel (%p221) target = $region32
        $region31: #{tpu_custom_call.1} parent=11 // pred_region
          _
        $region32: #{tpu_custom_call.1} parent=11 // pred_fallthru
          _
        // Predicated region
        $region33: #{tpu_custom_call.1} parent=11 // pred_check
          %p224 = pneg %p168
        $region34: #{tpu_custom_call.1} parent=11 // pred_check_branch
          %226 = sbr.rel (%p224) target = $region36
        $region35: #{tpu_custom_call.1} parent=11 // pred_region
          _
        $region36: #{tpu_custom_call.1} parent=11 // pred_fallthru
          _
      $region12: #{tpu_custom_call.1} parent=5 // pred_fallthru
        _
      %p227 = scmp.lt.s32.totalorder %s16, 2
      // Predicated region
      $region37: #{tpu_custom_call.1} parent=5 // pred_check
        %p228 = pneg %p227
      $region38: #{tpu_custom_call.1} parent=5 // pred_check_branch
        %230 = sbr.rel (%p228) target = $region40
      $region39: #{tpu_custom_call.1} parent=5 // pred_region
        // Predicated region
        $region41: #{tpu_custom_call.1} parent=39 // pred_check
          %p231 = pneg %p36
        $region42: #{tpu_custom_call.1} parent=39 // pred_check_branch
          %233 = sbr.rel (%p231) target = $region44
        $region43: #{tpu_custom_call.1} parent=39 // pred_region
          %s234 = smul.u32 2, %s16
          %p235 = scmp.lt.s32.totalorder %s234, 3
          %s236 = scalar_select %p235, %s234, 3
          %s237 = smul.addr %s236, 8
          %s238 = scalar_lea.vmem %s0, %s237
          %s239 = smul.u32 2, %s16
        $region44: #{tpu_custom_call.1} parent=39 // pred_fallthru
          _
      $region40: #{tpu_custom_call.1} parent=5 // pred_fallthru
        _
      %p240 = scmp.le.s32.totalorder 1, %s16
      %p241 = scmp.lt.s32.totalorder %s16, 3
      %p242 = pnand %p240, %p241
      %p243 = pneg %p242
      // Predicated region
      $region45: #{tpu_custom_call.1} parent=5 // pred_check
        _
      $region46: #{tpu_custom_call.1} parent=5 // pred_check_branch
        %245 = sbr.rel (%p242) target = $region48
      $region47: #{tpu_custom_call.1} parent=5 // pred_region
        %s246 = ssub.s32 %s16, 1
        %s247 = smul.u32 2, %s21
        %p248 = scmp.lt.s32.totalorder %s247, 3
        %s249 = scalar_select %p248, %s247, 3
        %s250 = smul.addr %s249, 8
        %s251 = scalar_lea.vmem %s0, %s250
        %p252 = pneg %p42
        %p253 = pneg %p39
        %p254 = pneg %p63
        %p255 = pneg %p60
        %p256 = pneg %p84
        %p257 = pneg %p81
        %p258 = pneg %p105
        %p259 = pneg %p102
        %p260 = pneg %p126
        %p261 = pneg %p123
        %p262 = pneg %p147
        %p263 = pneg %p144
        %p264 = pneg %p168
        %p265 = pneg %p165
        %p266 = pneg %p194
        %p267 = pneg %p191
        %s268 = sand.u32 %s181, 1
        %s269 = scalar_lea.sflag [#allocation3], %s268
        %s270 = sand.u32 %s181, 1
        %s271 = scalar_lea.vmem [#allocation2], %s270
        %s272 = smul.u32 2, %s21
        %p273 = scmp.lt.s32.totalorder %s272, 3
        %s274 = scalar_select %p273, %s272, 3
        %s275 = smul.addr %s274, 8
        %s276 = scalar_lea.vmem %s0, %s275
        %s277 = smul.u32 2, %s21
        %v278 = vld [vmem:[%s276] sm:$0xff]
        %v279 = vld [vmem:[%s276 + $0x8] sm:$0xff]
        %v280 = vlaneseq
        %v281 = vand.u32 %v280, 127
        %282 = vset.pattern.permute.xlu0 0
        %283 = vperm.xlu0 %282, %v278
        %v284 = vpop.permute.xlu0 %283
        %285 = vset.pattern.permute.xlu0 0
        %286 = vperm.xlu0 %285, %v279
        %v287 = vpop.permute.xlu0 %286
        %vm288 = vcmp.eq.s32.totalorder %v281, %v284
        %vm289 = vcmp.eq.s32.totalorder %v281, %v287
        %v290 = vsel %vm288, 1, 0
        %v291 = vsel %vm289, 1, 0
        %v292 = vcvt.s32.f32 %v290
        %v293 = vcvt.s32.f32 %v291
        %v294 = vld [vmem:[%s1] sm:$0xff]
        %v295 = vld [vmem:[%s1 + $0x8] sm:$0xff]
        %v296 = vld [vmem:[%s1 + $0x10] sm:$0xff]
        %v297 = vld [vmem:[%s1 + $0x18] sm:$0xff]
        %v298 = vld [vmem:[%s1 + $0x20] sm:$0xff]
        %v299 = vld [vmem:[%s1 + $0x28] sm:$0xff]
        %v300 = vld [vmem:[%s1 + $0x30] sm:$0x3]
        %vm301 = vcmask 408576
        %v303 = vsel %vm301, %v292, 0
        %v306 = vsel %vm301, %v293, 0
        %vm308 = vcmask 1041408
        %v310 = vsel %vm308, %v300, 0
        %312 = vmatprep.subr.mxu0 0.0
        %313 = vmatpush1.msra.mxu0 0.0
        %314 = vmatprep.subr.mxu0 0.0
        %315 = vmatpush1.msra.mxu0 0.0
        %316 = vmatprep.subr.mxu0 0.0
        %317 = vmatpush1.msra.mxu0 0.0
        %318 = vmatprep.subr.mxu0 0.0
        %319 = vmatpush1.msra.mxu0 0.0
        %320 = vmatprep.subr.mxu0 0.0
        %321 = vmatpush1.msra.mxu0 0.0
        %322 = vmatprep.subr.mxu0 0.0
        %323 = vmatpush1.msra.mxu0 0.0
        %324 = vmatprep.subr.mxu0 0.0
        %325 = vmatpush1.msra.mxu0 0.0
        %326 = vmatprep.subr.mxu0 0.0
        %327 = vmatpush1.msra.mxu0 0.0
        %328 = vmatprep.subr.mxu0 0.0
        %329 = vmatpush1.msra.mxu0 0.0
        %330 = vmatprep.subr.mxu0 0.0
        %331 = vmatpush1.msra.mxu0 %v310
        %332 = vmatprep.subr.mxu0 0.0
        %333 = vmatpush1.msra.mxu0 %v299
        %334 = vmatprep.subr.mxu0 0.0
        %335 = vmatpush1.msra.mxu0 %v298
        %336 = vmatprep.subr.mxu0 0.0
        %337 = vmatpush1.msra.mxu0 %v297
        %338 = vmatprep.subr.mxu0 0.0
        %339 = vmatpush1.msra.mxu0 %v296
        %340 = vmatprep.subr.mxu0 0.0
        %341 = vmatpush1.msra.mxu0 %v295
        %342 = vmatprep.subr.mxu0 0.0
        %343 = vmatpush1.msra.mxu0 %v294
        %344 = vmatprep.subr.mxu0 0.0
        %345 = vmatpush2.msra.mxu0 0.0
        %346 = vmatprep.subr.mxu0 0.0
        %347 = vmatpush2.msra.mxu0 0.0
        %348 = vmatprep.subr.mxu0 0.0
        %349 = vmatpush2.msra.mxu0 0.0
        %350 = vmatprep.subr.mxu0 0.0
        %351 = vmatpush2.msra.mxu0 0.0
        %352 = vmatprep.subr.mxu0 0.0
        %353 = vmatpush2.msra.mxu0 0.0
        %354 = vmatprep.subr.mxu0 0.0
        %355 = vmatpush2.msra.mxu0 0.0
        %356 = vmatprep.subr.mxu0 0.0
        %357 = vmatpush2.msra.mxu0 0.0
        %358 = vmatprep.subr.mxu0 0.0
        %359 = vmatpush2.msra.mxu0 0.0
        %360 = vmatprep.subr.mxu0 0.0
        %361 = vmatpush2.msra.mxu0 0.0
        %362 = vmatprep.subr.mxu0 0.0
        %363 = vmatpush2.msra.mxu0 0.0
        %364 = vmatprep.subr.mxu0 0.0
        %365 = vmatpush2.msra.mxu0 0.0
        %366 = vmatprep.subr.mxu0 0.0
        %367 = vmatpush2.msra.mxu0 0.0
        %368 = vmatprep.subr.mxu0 0.0
        %369 = vmatpush2.msra.mxu0 0.0
        %370 = vmatprep.subr.mxu0 0.0
        %371 = vmatpush2.msra.mxu0 0.0
        %372 = vmatprep.subr.mxu0 0.0
        %373 = vmatpush2.msra.mxu0 0.0
        %374 = vmatprep.subr.mxu0 0.0
        %375 = vmatpush2.msra.mxu0 0.0
        %376 = vmatprep.mubr.f32.mxu0 0.0
        %377 = vmatmul.mubr.f32.gmra.mxu0 %v303
        %v378 = vpop.f32.mrf.mxu0
        %v379 = vadd.f32 0.0, %v378
        %v380 = vpop.f32.mrf.mxu0
        %381 = vmatprep.mubr.f32.mxu0 0.0
        %382 = vmatmul.mubr.f32.gmra.mxu0 %v306
        %v383 = vpop.f32.mrf.mxu0
        %v384 = vadd.f32 0.0, %v383
        %v385 = vpop.f32.mrf.mxu0
        %386 = vdwg.mxu0
        %v387 = vrot.slane %v379, 1
        %v388 = vrot.slane %v384, 1
        %v389 = vlaneseq
        %v390 = vshrl.u32 %v389, 7
        %vm391 = vcmp.lt.s32.totalorder %v390, 7
        %v392 = vsel %vm391, %v387, %v388
        %v393 = vsel %vm391, %v388, %v387
        %v394 = vrot.slane %v379, 2
        %v395 = vrot.slane %v384, 2
        %vm396 = vcmp.lt.s32.totalorder %v390, 6
        %v397 = vsel %vm396, %v394, %v395
        %v398 = vsel %vm396, %v395, %v394
        %v399 = vrot.slane %v379, 3
        %v400 = vrot.slane %v384, 3
        %vm401 = vcmp.lt.s32.totalorder %v390, 5
        %v402 = vsel %vm401, %v399, %v400
        %v403 = vsel %vm401, %v400, %v399
        %v404 = vrot.slane %v379, 4
        %v405 = vrot.slane %v384, 4
        %vm406 = vcmp.lt.s32.totalorder %v390, 4
        %v407 = vsel %vm406, %v404, %v405
        %v408 = vsel %vm406, %v405, %v404
        %411 = vrot.lane.b32.xlu0 %v392, 32
        %v412 = vpop.permute.xlu0 %411
        %413 = vrot.lane.b32.xlu0 %v393, 32
        %v414 = vpop.permute.xlu0 %413
        %419 = vrot.lane.b32.xlu0 %v397, 64
        %v420 = vpop.permute.xlu0 %419
        %421 = vrot.lane.b32.xlu0 %v398, 64
        %v422 = vpop.permute.xlu0 %421
        %427 = vrot.lane.b32.xlu0 %v402, 96
        %v428 = vpop.permute.xlu0 %427
        %429 = vrot.lane.b32.xlu0 %v403, 96
        %v430 = vpop.permute.xlu0 %429
        %vm433 = vcmask 261120
        %v434 = vsel %vm433, %v379, %v412
        %v435 = vsel %vm433, %v384, %v414
        %vm436 = vcmask 523264
        %v437 = vsel %vm436, %v434, %v420
        %v438 = vsel %vm436, %v435, %v422
        %vm439 = vcmask 785408
        %v440 = vsel %vm439, %v437, %v428
        %v441 = vsel %vm439, %v438, %v430
        %v442 = vld [vmem:[%s2] sm:$0xff]
        %v443 = vld [vmem:[%s2 + $0x8] sm:$0xff]
        %v444 = vld [vmem:[%s2 + $0x10] sm:$0xff]
        %v445 = vld [vmem:[%s2 + $0x18] sm:$0xff]
        %v446 = vld [vmem:[%s2 + $0x20] sm:$0xff]
        %v447 = vld [vmem:[%s2 + $0x28] sm:$0xff]
        %v448 = vld [vmem:[%s2 + $0x30] sm:$0xff]
        %v449 = vld [vmem:[%s2 + $0x38] sm:$0xff]
        %v450 = vld [vmem:[%s2 + $0x40] sm:$0xff]
        %v451 = vld [vmem:[%s2 + $0x48] sm:$0xff]
        %v452 = vld [vmem:[%s2 + $0x50] sm:$0xff]
        %v453 = vld [vmem:[%s2 + $0x58] sm:$0xff]
        %v454 = vld [vmem:[%s2 + $0x60] sm:$0xff]
        %v455 = vld [vmem:[%s2 + $0x68] sm:$0xff]
        %v456 = vld [vmem:[%s2 + $0x70] sm:$0xff]
        %v457 = vld [vmem:[%s2 + $0x78] sm:$0xff]
        %v458 = vld [vmem:[%s2 + $0x80] sm:$0xff]
        %v459 = vld [vmem:[%s2 + $0x88] sm:$0xff]
        %v460 = vld [vmem:[%s2 + $0x90] sm:$0xff]
        %v461 = vld [vmem:[%s2 + $0x98] sm:$0xff]
        %v462 = vld [vmem:[%s3] sm:$0x1]
        %v464 = vlaneseq
        %v465 = vshrl.u32 %v464, 7
        %v466 = vsub.s32 0, %v465
        %v467 = vrot.slane %v462, %v466
        %v470 = vsel %vm433, %v407, 0
        %v473 = vsel %vm433, %v408, 0
        %475 = vmatprep.subr.mxu0 0.0
        %476 = vmatpush1.msra.mxu0 %v457
        %477 = vmatprep.subr.mxu0 0.0
        %478 = vmatpush1.msra.mxu0 %v456
        %479 = vmatprep.subr.mxu0 0.0
        %480 = vmatpush1.msra.mxu0 %v455
        %481 = vmatprep.subr.mxu0 0.0
        %482 = vmatpush1.msra.mxu0 %v454
        %483 = vmatprep.subr.mxu0 0.0
        %484 = vmatpush1.msra.mxu0 %v453
        %485 = vmatprep.subr.mxu0 0.0
        %486 = vmatpush1.msra.mxu0 %v452
        %487 = vmatprep.subr.mxu0 0.0
        %488 = vmatpush1.msra.mxu0 %v451
        %489 = vmatprep.subr.mxu0 0.0
        %490 = vmatpush1.msra.mxu0 %v450
        %491 = vmatprep.subr.mxu0 0.0
        %492 = vmatpush1.msra.mxu0 %v449
        %493 = vmatprep.subr.mxu0 0.0
        %494 = vmatpush1.msra.mxu0 %v448
        %495 = vmatprep.subr.mxu0 0.0
        %496 = vmatpush1.msra.mxu0 %v447
        %497 = vmatprep.subr.mxu0 0.0
        %498 = vmatpush1.msra.mxu0 %v446
        %499 = vmatprep.subr.mxu0 0.0
        %500 = vmatpush1.msra.mxu0 %v445
        %501 = vmatprep.subr.mxu0 0.0
        %502 = vmatpush1.msra.mxu0 %v444
        %503 = vmatprep.subr.mxu0 0.0
        %504 = vmatpush1.msra.mxu0 %v443
        %505 = vmatprep.subr.mxu0 0.0
        %506 = vmatpush1.msra.mxu0 %v442
        %507 = vmatprep.subr.mxu0 0.0
        %508 = vmatpush2.msra.mxu0 0.0
        %509 = vmatprep.subr.mxu0 0.0
        %510 = vmatpush2.msra.mxu0 0.0
        %511 = vmatprep.subr.mxu0 0.0
        %512 = vmatpush2.msra.mxu0 0.0
        %513 = vmatprep.subr.mxu0 0.0
        %514 = vmatpush2.msra.mxu0 0.0
        %515 = vmatprep.subr.mxu0 0.0
        %516 = vmatpush2.msra.mxu0 0.0
        %517 = vmatprep.subr.mxu0 0.0
        %518 = vmatpush2.msra.mxu0 0.0
        %519 = vmatprep.subr.mxu0 0.0
        %520 = vmatpush2.msra.mxu0 0.0
        %521 = vmatprep.subr.mxu0 0.0
        %522 = vmatpush2.msra.mxu0 0.0
        %523 = vmatprep.subr.mxu0 0.0
        %524 = vmatpush2.msra.mxu0 0.0
        %525 = vmatprep.subr.mxu0 0.0
        %526 = vmatpush2.msra.mxu0 0.0
        %527 = vmatprep.subr.mxu0 0.0
        %528 = vmatpush2.msra.mxu0 0.0
        %529 = vmatprep.subr.mxu0 0.0
        %530 = vmatpush2.msra.mxu0 0.0
        %531 = vmatprep.subr.mxu0 0.0
        %532 = vmatpush2.msra.mxu0 %v461
        %533 = vmatprep.subr.mxu0 0.0
        %534 = vmatpush2.msra.mxu0 %v460
        %535 = vmatprep.subr.mxu0 0.0
        %536 = vmatpush2.msra.mxu0 %v459
        %537 = vmatprep.subr.mxu0 0.0
        %538 = vmatpush2.msra.mxu0 %v458
        %539 = vmatprep.mubr.f32.mxu0 %v470
        %540 = vmatmul.mubr.f32.gmra.mxu0 %v440
        %v541 = vpop.f32.mrf.mxu0
        %v542 = vadd.f32 %v467, %v541
        %v543 = vpop.f32.mrf.mxu0
        %544 = vmatprep.mubr.f32.mxu0 %v473
        %545 = vmatmul.mubr.f32.gmra.mxu0 %v441
        %v546 = vpop.f32.mrf.mxu0
        %v547 = vadd.f32 %v467, %v546
        %v548 = vpop.f32.mrf.mxu0
        %549 = vdwg.mxu0
        %v550 = vmax.f32 %v542, 0.0
        %v551 = vmax.f32 %v547, 0.0
        %v552 = vadd.s32 %v390, 8
        %v553 = vld [vmem:[%s4] sm:$0x1]
        %v554 = vlaneseq
        %v555 = vshrl.u32 %v554, 7
        %v556 = vsub.s32 0, %v555
        %v557 = vrot.slane %v553, %v556
        %vm558 = vcmp.le.s32.totalorder %v390, %v557
        %vm559 = vcmp.le.s32.totalorder %v552, %v557
        %v560 = vsel %vm558, %v550, 0.0
        %v561 = vsel %vm559, %v551, 0.0
        %vm562 = vcmask 392192
        %v563 = vsel %vm562, %v560, -inf
        %v564 = vsel %vm562, %v561, -inf
        %v565 = vmax.f32 %v563, %v564
        %v566 = vrot.slane %v565, 4
        %v567 = vmax.f32 %v565, %v566
        %v568 = vrot.slane %v567, 2
        %v569 = vmax.f32 %v567, %v568
        %v570 = vrot.slane %v569, 1
        %v571 = vmax.f32 %v569, %v570
        %v572 = vld [vmem:[%s5] sm:$0xff]
        %v573 = vld [vmem:[%s5 + $0x8] sm:$0xff]
        %v574 = vld [vmem:[%s5 + $0x10] sm:$0xff]
        %v575 = vld [vmem:[%s5 + $0x18] sm:$0xff]
        %v576 = vld [vmem:[%s5 + $0x20] sm:$0xff]
        %v577 = vld [vmem:[%s5 + $0x28] sm:$0xff]
        %v578 = vld [vmem:[%s6] sm:$0x1]
        %v580 = vsel %vm562, %v571, 0
        %582 = vmatprep.subr.mxu0 0.0
        %583 = vmatpush1.msra.mxu0 0.0
        %584 = vmatprep.subr.mxu0 0.0
        %585 = vmatpush1.msra.mxu0 0.0
        %586 = vmatprep.subr.mxu0 0.0
        %587 = vmatpush1.msra.mxu0 0.0
        %588 = vmatprep.subr.mxu0 0.0
        %589 = vmatpush1.msra.mxu0 0.0
        %590 = vmatprep.subr.mxu0 0.0
        %591 = vmatpush1.msra.mxu0 0.0
        %592 = vmatprep.subr.mxu0 0.0
        %593 = vmatpush1.msra.mxu0 0.0
        %594 = vmatprep.subr.mxu0 0.0
        %595 = vmatpush1.msra.mxu0 0.0
        %596 = vmatprep.subr.mxu0 0.0
        %597 = vmatpush1.msra.mxu0 0.0
        %598 = vmatprep.subr.mxu0 0.0
        %599 = vmatpush1.msra.mxu0 0.0
        %600 = vmatprep.subr.mxu0 0.0
        %601 = vmatpush1.msra.mxu0 0.0
        %602 = vmatprep.subr.mxu0 0.0
        %603 = vmatpush1.msra.mxu0 %v577
        %604 = vmatprep.subr.mxu0 0.0
        %605 = vmatpush1.msra.mxu0 %v576
        %606 = vmatprep.subr.mxu0 0.0
        %607 = vmatpush1.msra.mxu0 %v575
        %608 = vmatprep.subr.mxu0 0.0
        %609 = vmatpush1.msra.mxu0 %v574
        %610 = vmatprep.subr.mxu0 0.0
        %611 = vmatpush1.msra.mxu0 %v573
        %612 = vmatprep.subr.mxu0 0.0
        %613 = vmatpush1.msra.mxu0 %v572
        %614 = vmatprep.subr.mxu0 0.0
        %615 = vmatpush2.msra.mxu0 0.0
        %616 = vmatprep.subr.mxu0 0.0
        %617 = vmatpush2.msra.mxu0 0.0
        %618 = vmatprep.subr.mxu0 0.0
        %619 = vmatpush2.msra.mxu0 0.0
        %620 = vmatprep.subr.mxu0 0.0
        %621 = vmatpush2.msra.mxu0 0.0
        %622 = vmatprep.subr.mxu0 0.0
        %623 = vmatpush2.msra.mxu0 0.0
        %624 = vmatprep.subr.mxu0 0.0
        %625 = vmatpush2.msra.mxu0 0.0
        %626 = vmatprep.subr.mxu0 0.0
        %627 = vmatpush2.msra.mxu0 0.0
        %628 = vmatprep.subr.mxu0 0.0
        %629 = vmatpush2.msra.mxu0 0.0
        %630 = vmatprep.subr.mxu0 0.0
        %631 = vmatpush2.msra.mxu0 0.0
        %632 = vmatprep.subr.mxu0 0.0
        %633 = vmatpush2.msra.mxu0 0.0
        %634 = vmatprep.subr.mxu0 0.0
        %635 = vmatpush2.msra.mxu0 0.0
        %636 = vmatprep.subr.mxu0 0.0
        %637 = vmatpush2.msra.mxu0 0.0
        %638 = vmatprep.subr.mxu0 0.0
        %639 = vmatpush2.msra.mxu0 0.0
        %640 = vmatprep.subr.mxu0 0.0
        %641 = vmatpush2.msra.mxu0 0.0
        %642 = vmatprep.subr.mxu0 0.0
        %643 = vmatpush2.msra.mxu0 0.0
        %644 = vmatprep.subr.mxu0 0.0
        %645 = vmatpush2.msra.mxu0 0.0
        %646 = vmatprep.mubr.f32.mxu0 0.0
        %647 = vmatmul.mubr.f32.gmra.mxu0 %v580
        %v648 = vpop.f32.mrf.mxu0
        %v649 = vadd.f32 %v578, %v648
        %v650 = vpop.f32.mrf.mxu0
        %651 = vdwg.mxu0
        %vm652 = vcmask 122880
        %653 = vst.msk [vmem:[%s271] sm:$0x1] %vm652, %v649
        %s654 = sand.u32 %s181, 1
        %s655 = scalar_lea.sflag [#allocation3], %s654
        %s656 = sand.u32 %s181, 1
        %s657 = scalar_lea.vmem [#allocation2], %s656
        // Predicated region
        $region49: #{tpu_custom_call.1} parent=47 // pred_check
          %p658 = pneg %p191
        $region50: #{tpu_custom_call.1} parent=47 // pred_check_branch
          %660 = sbr.rel (%p658) target = $region52
        $region51: #{tpu_custom_call.1} parent=47 // pred_region
          %s662 = ssub.s32 16, 16
          %663 = vsyncadd %s655, %s662
          %s664 = smul.addr %s21, 16
          %s665 = scalar_lea.hbm %s7, %s664
          %s667 = sshll.u32 %s657, 4
          %s668 = int_to_ptr.vmem [resolvable:$true] %s667
          %670 = dma.vmem_to_hbm [thread:$0]  %s668, 16, %s665, %s655
        $region52: #{tpu_custom_call.1} parent=47 // pred_fallthru
          _
      $region48: #{tpu_custom_call.1} parent=5 // pred_fallthru
        _
      %p671 = scmp.le.s32.totalorder 2, %s16
      // Predicated region
      $region53: #{tpu_custom_call.1} parent=5 // pred_check
        %p672 = pneg %p671
      $region54: #{tpu_custom_call.1} parent=5 // pred_check_branch
        %674 = sbr.rel (%p672) target = $region56
      $region55: #{tpu_custom_call.1} parent=5 // pred_region
        %s675 = ssub.s32 %s16, 2
        // Predicated region
        $region57: #{tpu_custom_call.1} parent=55 // pred_check
          %p676 = pneg %p197
        $region58: #{tpu_custom_call.1} parent=55 // pred_check_branch
          %678 = sbr.rel (%p676) target = $region60
        $region59: #{tpu_custom_call.1} parent=55 // pred_region
          %s679 = sand.u32 %s182, 1
          %s680 = scalar_lea.sflag [#allocation3], %s679
          %s681 = sand.u32 %s182, 1
          %s682 = scalar_lea.vmem [#allocation2], %s681
          %683 = dma.done %s680, 16
        $region60: #{tpu_custom_call.1} parent=55 // pred_fallthru
          _
      $region56: #{tpu_custom_call.1} parent=5 // pred_fallthru
        _
    $region6: #{tpu_custom_call.1} parent=1 // loop_footer
      %s20 = sadd.s32 1, %s16
    $region7: #{tpu_custom_call.1} parent=1 // loop_footer_branch
      %15 = sbr.rel target = $region3
    $region8: #{tpu_custom_call.1} parent=1 // loop_exit
      _
    %684 = vsyncpa [#allocation3], 1
    %s685 = scalar_lea.sflag [#allocation3], 1
    %686 = vsyncpa %s685, 1

</llo_original>
